<compile_context>
chip_gen: v6e
topology: v6e:2x2x1
jax: 0.10.0
libtpu: 0.0.40
codegen_flags: <defaults>
</compile_context>

<pallas_src>
import functools

import jax
import jax.numpy as jnp
from jax.experimental import pallas as pl
from jax.experimental.pallas import tpu as pltpu

_BN_EPS = 1e-5


def _round_up(x, m):
    return ((x + m - 1) // m) * m


def _choose_feature_tiles(D, O, tile_d, tile_o):
    td = D if D <= tile_d else tile_d
    Dp = D if D <= tile_d else _round_up(D, td)
    to = min(tile_o, _round_up(O, 128))
    Op = _round_up(O, to)
    return td, Dp, to, Op


# --------------------------------------------------------------------------
# Pass 1: per-feature batch statistics, N-tiled accumulation.
# Grid = (D tiles, N tiles); N is last ("arbitrary"), sum/sumsq live in VMEM
# scratch, scale/shift written in the finalize.
# --------------------------------------------------------------------------
def bn_stats_kernel(x_ref, gamma_ref, beta_ref, scale_ref, shift_ref,
                    sum_ref, sumsq_ref, *, n_valid):
    n = pl.program_id(1)

    @pl.when(n == 0)
    def _():
        sum_ref[...] = jnp.zeros_like(sum_ref)
        sumsq_ref[...] = jnp.zeros_like(sumsq_ref)

    x = x_ref[...].astype(jnp.float32)                      # (tn, td)
    sum_ref[...] += jnp.sum(x, axis=0, keepdims=True)
    sumsq_ref[...] += jnp.sum(x * x, axis=0, keepdims=True)

    @pl.when(n == pl.num_programs(1) - 1)
    def _():
        inv_n = jnp.float32(1.0 / n_valid)
        mean = sum_ref[...] * inv_n
        var = jnp.maximum(sumsq_ref[...] * inv_n - mean * mean, 0.0)
        inv_std = jax.lax.rsqrt(var + _BN_EPS)
        scale = inv_std * gamma_ref[...]
        scale_ref[...] = scale
        shift_ref[...] = beta_ref[...] - mean * scale


# --------------------------------------------------------------------------
# Pass 2: y = relu(x * scale + shift), stored once as bf16.
# --------------------------------------------------------------------------
def bn_relu_kernel(x_ref, scale_ref, shift_ref, y_ref):
    y = jnp.maximum(x_ref[...] * scale_ref[...] + shift_ref[...], 0.0)
    y_ref[...] = y.astype(y_ref.dtype)


# --------------------------------------------------------------------------
# Pass 3: out = y_bf16 @ W_bf16 + b, tiled reduction with f32 accumulator.
# Grid = (N tiles, O tiles, D tiles); D last ("arbitrary").
# --------------------------------------------------------------------------
def cutlayer_mm_kernel(y_ref, w_ref, b_ref, out_ref, acc_ref):
    k = pl.program_id(2)

    @pl.when(k == 0)
    def _():
        acc_ref[...] = jnp.zeros_like(acc_ref)

    acc_ref[...] += jnp.dot(y_ref[...], w_ref[...],
                            preferred_element_type=jnp.float32)

    @pl.when(k == pl.num_programs(2) - 1)
    def _():
        out_ref[...] = (acc_ref[...] + b_ref[...]).astype(out_ref.dtype)


# --------------------------------------------------------------------------
# One-time parameter prep (hoisted out of the per-call path).
# --------------------------------------------------------------------------
def prepare_cutlayer_params(gamma, beta, weight_t, bias, *,
                            tile_d=1024, tile_o=1024):
    """gamma/beta: (1, D); weight_t: (D, O); bias: (1, O).

    Returns padded f32 gamma/beta (1, Dp), bf16 weight (Dp, Op), f32 bias
    (1, Op).  Padded rows/cols are zero so they contribute nothing.
    """
    D, O = weight_t.shape
    _, Dp, _, Op = _choose_feature_tiles(D, O, tile_d, tile_o)
    gamma_p = jnp.pad(gamma, ((0, 0), (0, Dp - D))) if Dp != D else gamma
    beta_p = jnp.pad(beta, ((0, 0), (0, Dp - D))) if Dp != D else beta
    if Dp != D or Op != O:
        w_p = jnp.pad(weight_t, ((0, Dp - D), (0, Op - O)))
    else:
        w_p = weight_t
    b_p = jnp.pad(bias, ((0, 0), (0, Op - O))) if Op != O else bias
    return (gamma_p.astype(jnp.float32), beta_p.astype(jnp.float32),
            w_p.astype(jnp.bfloat16), b_p.astype(jnp.float32))


# --------------------------------------------------------------------------
# Forward wrapper.
# --------------------------------------------------------------------------
@functools.partial(jax.jit,
                   static_argnames=("out_nodes", "tile_n", "tile_d", "tile_o"))
def cutlayer_forward(x, gamma_p, beta_p, w_bf16, bias_p, *, out_nodes,
                     tile_n=512, tile_d=1024, tile_o=1024):
    """x: (N, D) f32; prepared params from prepare_cutlayer_params."""
    N, D = x.shape
    Dp = gamma_p.shape[1]
    Op = w_bf16.shape[1]
    assert w_bf16.shape[0] == Dp

    td = Dp if Dp <= tile_d else tile_d
    to = Op if Op <= tile_o else tile_o
    tn = min(tile_n, _round_up(N, 8))
    Np = _round_up(N, tn)

    # v7x has 2 TensorCores sharded over "parallel" axes: try to expose >= 2
    # parallel tiles when both parallel extents would otherwise be 1.
    if Np // tn == 1 and Op // to == 1:
        half = _round_up(tn // 2, 8)
        if 0 < half < tn and Np % half == 0:
            tn = half

    nd = Dp // td
    nn = Np // tn
    no = Op // to

    # Zero-pad x rows (and feature cols only when D had to be tiled/padded).
    if Np != N or Dp != D:
        x_p = jnp.pad(x, ((0, Np - N), (0, Dp - D)))
    else:
        x_p = x

    # ---- pass 1: global BN stats (N-tiled sum / sumsq reduction) ----
    stats_kernel = functools.partial(bn_stats_kernel, n_valid=float(N))
    scale, shift = pl.pallas_call(
        stats_kernel,
        out_shape=(jax.ShapeDtypeStruct((1, Dp), jnp.float32),
                   jax.ShapeDtypeStruct((1, Dp), jnp.float32)),
        grid_spec=pltpu.PrefetchScalarGridSpec(
            num_scalar_prefetch=0,
            grid=(nd, nn),
            in_specs=[
                pl.BlockSpec((tn, td), lambda d, n: (n, d)),   # x
                pl.BlockSpec((1, td), lambda d, n: (0, d)),    # gamma
                pl.BlockSpec((1, td), lambda d, n: (0, d)),    # beta
            ],
            out_specs=(pl.BlockSpec((1, td), lambda d, n: (0, d)),
                       pl.BlockSpec((1, td), lambda d, n: (0, d))),
            scratch_shapes=[pltpu.VMEM((1, td), jnp.float32),
                            pltpu.VMEM((1, td), jnp.float32)],
        ),
        compiler_params=pltpu.CompilerParams(
            dimension_semantics=("parallel", "arbitrary")),
        cost_estimate=pl.CostEstimate(
            flops=3 * Np * Dp, transcendentals=Dp,
            bytes_accessed=4 * (Np * Dp + 6 * Dp)),
    )(x_p, gamma_p, beta_p)

    # ---- pass 2: normalized+ReLU activations written once as bf16 ----
    y = pl.pallas_call(
        bn_relu_kernel,
        out_shape=jax.ShapeDtypeStruct((Np, Dp), jnp.bfloat16),
        grid_spec=pltpu.PrefetchScalarGridSpec(
            num_scalar_prefetch=0,
            grid=(nn, nd),
            in_specs=[
                pl.BlockSpec((tn, td), lambda i, d: (i, d)),   # x
                pl.BlockSpec((1, td), lambda i, d: (0, d)),    # scale
                pl.BlockSpec((1, td), lambda i, d: (0, d)),    # shift
            ],
            out_specs=pl.BlockSpec((tn, td), lambda i, d: (i, d)),
        ),
        compiler_params=pltpu.CompilerParams(
            dimension_semantics=("parallel", "parallel")),
        cost_estimate=pl.CostEstimate(
            flops=3 * Np * Dp, transcendentals=0,
            bytes_accessed=4 * Np * Dp + 2 * Np * Dp),
    )(x_p, scale, shift)

    # ---- pass 3: y_bf16 @ W_bf16 + b ----
    out_p = pl.pallas_call(
        cutlayer_mm_kernel,
        out_shape=jax.ShapeDtypeStruct((Np, Op), jnp.float32),
        grid_spec=pltpu.PrefetchScalarGridSpec(
            num_scalar_prefetch=0,
            grid=(nn, no, nd),
            in_specs=[
                pl.BlockSpec((tn, td), lambda i, j, k: (i, k)),   # y (bf16)
                pl.BlockSpec((td, to), lambda i, j, k: (k, j)),   # W (bf16)
                pl.BlockSpec((1, to), lambda i, j, k: (0, j)),    # bias
            ],
            out_specs=pl.BlockSpec((tn, to), lambda i, j, k: (i, j)),
            scratch_shapes=[pltpu.VMEM((tn, to), jnp.float32)],
        ),
        compiler_params=pltpu.CompilerParams(
            dimension_semantics=("parallel", "parallel", "arbitrary"),
            vmem_limit_bytes=48 * 1024 * 1024),
        cost_estimate=pl.CostEstimate(
            flops=2 * Np * Dp * Op, transcendentals=0,
            bytes_accessed=2 * Np * Dp * no + 2 * Dp * Op + 4 * Np * Op),
    )(y, w_bf16, bias_p)

    return out_p[:N, :out_nodes]


if __name__ == "__main__":
    batch, in_nodes, out_nodes = 8, 32, 16

    key = jax.random.PRNGKey(0)
    kx, kw, kb = jax.random.split(key, 3)

    # Input
    x = jax.random.normal(kx, (batch, in_nodes), dtype=jnp.float32)

    # BatchNorm1d parameters (PyTorch init: gamma=1, beta=0)
    gamma = jnp.ones((1, in_nodes), dtype=jnp.float32)
    beta = jnp.zeros((1, in_nodes), dtype=jnp.float32)

    # Linear parameters (stored pre-transposed as (D, O))
    bound = 1.0 / (in_nodes ** 0.5)
    weight_t = jax.random.uniform(
        kw, (in_nodes, out_nodes), minval=-bound, maxval=bound,
        dtype=jnp.float32)
    bias = jax.random.uniform(
        kb, (1, out_nodes), minval=-bound, maxval=bound, dtype=jnp.float32)

    # One-time param prep (pad + bf16 cast hoisted out of the hot path).
    gamma_p, beta_p, w_bf16, bias_p = prepare_cutlayer_params(
        gamma, beta, weight_t, bias)

    out = cutlayer_forward(x, gamma_p, beta_p, w_bf16, bias_p,
                           out_nodes=out_nodes)
    jax.block_until_ready(out)

    # Pure-JAX f32 reference (kernel matmul is bf16-in / f32-accumulate, so
    # use a slightly loosened tolerance).
    mean = jnp.mean(x, axis=0, keepdims=True)
    var = jnp.mean((x - mean) ** 2, axis=0, keepdims=True)
    ref = jnp.maximum((x - mean) * jax.lax.rsqrt(var + _BN_EPS) * gamma + beta,
                      0.0)
    ref = ref @ weight_t + bias
    assert out.shape == ref.shape
    assert jnp.allclose(out, ref, atol=1e-2, rtol=1e-2), "mismatch vs reference"

    print("KERNEL_OK")
</pallas_src>

<mosaic_0001>
module attributes {stable_mosaic.version = 11 : i64} {
  func.func @bn_relu_kernel(%arg0: i32, %arg1: i32, %arg2: memref<8x32xf32, #tpu.memory_space<vmem>>, %arg3: memref<1x32xf32, #tpu.memory_space<vmem>>, %arg4: memref<1x32xf32, #tpu.memory_space<vmem>>, %arg5: memref<8x32xbf16, #tpu.memory_space<vmem>>) attributes {dimension_semantics = [#tpu.dimension_semantics<parallel>, #tpu.dimension_semantics<parallel>], iteration_bounds = array<i64: 1, 1>, scalar_prefetch = 0 : i64, scratch_operands = 0 : i64, tpu.core_type = #tpu.core_type<tc>, window_params = [{transform_indices = @transform_0, window_bounds = array<i64: 8, 32>}, {transform_indices = @transform_1, window_bounds = array<i64: 1, 32>}, {transform_indices = @transform_2, window_bounds = array<i64: 1, 32>}, {transform_indices = @transform_3, window_bounds = array<i64: 8, 32>}]} {
    %c0 = arith.constant 0 : index
    %c0_0 = arith.constant 0 : index
    %0 = vector.load %arg2[%c0, %c0_0] : memref<8x32xf32, #tpu.memory_space<vmem>>, vector<8x32xf32>
    %c0_1 = arith.constant 0 : index
    %c0_2 = arith.constant 0 : index
    %1 = vector.load %arg3[%c0_1, %c0_2] : memref<1x32xf32, #tpu.memory_space<vmem>>, vector<1x32xf32>
    %2 = vector.broadcast %1 : vector<1x32xf32> to vector<8x32xf32>
    %3 = arith.mulf %0, %2 : vector<8x32xf32>
    %c0_3 = arith.constant 0 : index
    %c0_4 = arith.constant 0 : index
    %4 = vector.load %arg4[%c0_3, %c0_4] : memref<1x32xf32, #tpu.memory_space<vmem>>, vector<1x32xf32>
    %5 = vector.broadcast %4 : vector<1x32xf32> to vector<8x32xf32>
    %6 = arith.addf %3, %5 : vector<8x32xf32>
    %cst = arith.constant 0.000000e+00 : f32
    %7 = vector.broadcast %cst : f32 to vector<8x32xf32>
    %8 = arith.maximumf %6, %7 : vector<8x32xf32>
    %9 = arith.truncf %8 : vector<8x32xf32> to vector<8x32xbf16>
    %c0_5 = arith.constant 0 : index
    %c0_6 = arith.constant 0 : index
    %10 = vector.load %arg5[%c0_5, %c0_6] : memref<8x32xbf16, #tpu.memory_space<vmem>>, vector<8x32xbf16>
    tpu.vector_store %arg5[%c0_5, %c0_6], %9 {strides = array<i32>} : memref<8x32xbf16, #tpu.memory_space<vmem>>, vector<8x32xbf16>,
    return
  }
  func.func @transform_0(%arg0: i32, %arg1: i32) -> (i32, i32) {
    %c0_i32 = arith.constant 0 : i32
    return %arg0, %arg1 : i32, i32
  }
  func.func @transform_1(%arg0: i32, %arg1: i32) -> (i32, i32) {
    %c0_i32 = arith.constant 0 : i32
    %c0_i32_0 = arith.constant 0 : i32
    return %c0_i32, %arg1 : i32, i32
  }
  func.func @transform_2(%arg0: i32, %arg1: i32) -> (i32, i32) {
    %c0_i32 = arith.constant 0 : i32
    %c0_i32_0 = arith.constant 0 : i32
    return %c0_i32, %arg1 : i32, i32
  }
  func.func @transform_3(%arg0: i32, %arg1: i32) -> (i32, i32) {
    %c0_i32 = arith.constant 0 : i32
    return %arg0, %arg1 : i32, i32
  }
}

module attributes {stable_mosaic.version = 11 : i64} {
  func.func @bn_stats_kernel(%arg0: i32, %arg1: i32, %arg2: memref<8x32xf32, #tpu.memory_space<vmem>>, %arg3: memref<1x32xf32, #tpu.memory_space<vmem>>, %arg4: memref<1x32xf32, #tpu.memory_space<vmem>>, %arg5: memref<1x32xf32, #tpu.memory_space<vmem>>, %arg6: memref<1x32xf32, #tpu.memory_space<vmem>>, %arg7: memref<1x32xf32, #tpu.memory_space<vmem>>, %arg8: memref<1x32xf32, #tpu.memory_space<vmem>>) attributes {dimension_semantics = [#tpu.dimension_semantics<parallel>, #tpu.dimension_semantics<arbitrary>], iteration_bounds = array<i64: 1, 1>, scalar_prefetch = 0 : i64, scratch_operands = 2 : i64, tpu.core_type = #tpu.core_type<tc>, window_params = [{transform_indices = @transform_0, window_bounds = array<i64: 8, 32>}, {transform_indices = @transform_1, window_bounds = array<i64: 1, 32>}, {transform_indices = @transform_2, window_bounds = array<i64: 1, 32>}, {transform_indices = @transform_3, window_bounds = array<i64: 1, 32>}, {transform_indices = @transform_4, window_bounds = array<i64: 1, 32>}]} {
    %c0_i32 = arith.constant 0 : i32
    %0 = arith.cmpi eq, %arg1, %c0_i32 : i32
    %1 = arith.extui %0 : i1 to i32
    %c0_i32_0 = arith.constant 0 : i32
    %2 = arith.cmpi ne, %1, %c0_i32_0 : i32
    scf.if %2 {
      %cst_13 = arith.constant 0.000000e+00 : f32
      %18 = vector.broadcast %cst_13 : f32 to vector<1x32xf32>
      %c0_14 = arith.constant 0 : index
      %c0_15 = arith.constant 0 : index
      %19 = vector.load %arg7[%c0_14, %c0_15] : memref<1x32xf32, #tpu.memory_space<vmem>>, vector<1x32xf32>
      tpu.vector_store %arg7[%c0_14, %c0_15], %18 {strides = array<i32>} : memref<1x32xf32, #tpu.memory_space<vmem>>, vector<1x32xf32>,
      %cst_16 = arith.constant 0.000000e+00 : f32
      %20 = vector.broadcast %cst_16 : f32 to vector<1x32xf32>
      %c0_17 = arith.constant 0 : index
      %c0_18 = arith.constant 0 : index
      %21 = vector.load %arg8[%c0_17, %c0_18] : memref<1x32xf32, #tpu.memory_space<vmem>>, vector<1x32xf32>
      tpu.vector_store %arg8[%c0_17, %c0_18], %20 {strides = array<i32>} : memref<1x32xf32, #tpu.memory_space<vmem>>, vector<1x32xf32>,
    } else {
    }
    %c0 = arith.constant 0 : index
    %c0_1 = arith.constant 0 : index
    %3 = vector.load %arg2[%c0, %c0_1] : memref<8x32xf32, #tpu.memory_space<vmem>>, vector<8x32xf32>
    %c0_2 = arith.constant 0 : index
    %c0_3 = arith.constant 0 : index
    %4 = vector.load %arg7[%c0_2, %c0_3] : memref<1x32xf32, #tpu.memory_space<vmem>>, vector<1x32xf32>
    %cst = arith.constant dense<0.000000e+00> : vector<32xf32>
    %5 = vector.multi_reduction <add>, %3, %cst [0] : vector<8x32xf32> to vector<32xf32>
    %6 = vector.shape_cast %5 : vector<32xf32> to vector<1x32xf32>
    %7 = arith.addf %4, %6 : vector<1x32xf32>
    %c0_4 = arith.constant 0 : index
    %c0_5 = arith.constant 0 : index
    %8 = vector.load %arg7[%c0_4, %c0_5] : memref<1x32xf32, #tpu.memory_space<vmem>>, vector<1x32xf32>
    tpu.vector_store %arg7[%c0_4, %c0_5], %7 {strides = array<i32>} : memref<1x32xf32, #tpu.memory_space<vmem>>, vector<1x32xf32>,
    %c0_6 = arith.constant 0 : index
    %c0_7 = arith.constant 0 : index
    %9 = vector.load %arg8[%c0_6, %c0_7] : memref<1x32xf32, #tpu.memory_space<vmem>>, vector<1x32xf32>
    %10 = arith.mulf %3, %3 : vector<8x32xf32>
    %cst_8 = arith.constant dense<0.000000e+00> : vector<32xf32>
    %11 = vector.multi_reduction <add>, %10, %cst_8 [0] : vector<8x32xf32> to vector<32xf32>
    %12 = vector.shape_cast %11 : vector<32xf32> to vector<1x32xf32>
    %13 = arith.addf %9, %12 : vector<1x32xf32>
    %c0_9 = arith.constant 0 : index
    %c0_10 = arith.constant 0 : index
    %14 = vector.load %arg8[%c0_9, %c0_10] : memref<1x32xf32, #tpu.memory_space<vmem>>, vector<1x32xf32>
    tpu.vector_store %arg8[%c0_9, %c0_10], %13 {strides = array<i32>} : memref<1x32xf32, #tpu.memory_space<vmem>>, vector<1x32xf32>,
    %c0_i32_11 = arith.constant 0 : i32
    %15 = arith.cmpi eq, %arg1, %c0_i32_11 : i32
    %16 = arith.extui %15 : i1 to i32
    %c0_i32_12 = arith.constant 0 : i32
    %17 = arith.cmpi ne, %16, %c0_i32_12 : i32
    scf.if %17 {
      %c0_13 = arith.constant 0 : index
      %c0_14 = arith.constant 0 : index
      %18 = vector.load %arg7[%c0_13, %c0_14] : memref<1x32xf32, #tpu.memory_space<vmem>>, vector<1x32xf32>
      %cst_15 = arith.constant 1.250000e-01 : f32
      %19 = vector.broadcast %cst_15 : f32 to vector<1x32xf32>
      %20 = arith.mulf %18, %19 : vector<1x32xf32>
      %c0_16 = arith.constant 0 : index
      %c0_17 = arith.constant 0 : index
      %21 = vector.load %arg8[%c0_16, %c0_17] : memref<1x32xf32, #tpu.memory_space<vmem>>, vector<1x32xf32>
      %cst_18 = arith.constant 1.250000e-01 : f32
      %22 = vector.broadcast %cst_18 : f32 to vector<1x32xf32>
      %23 = arith.mulf %21, %22 : vector<1x32xf32>
      %24 = arith.mulf %20, %20 : vector<1x32xf32>
      %25 = arith.subf %23, %24 : vector<1x32xf32>
      %cst_19 = arith.constant 0.000000e+00 : f32
      %26 = vector.broadcast %cst_19 : f32 to vector<1x32xf32>
      %27 = arith.maximumf %25, %26 : vector<1x32xf32>
      %cst_20 = arith.constant 9.99999974E-6 : f32
      %28 = vector.broadcast %cst_20 : f32 to vector<1x32xf32>
      %29 = arith.addf %27, %28 : vector<1x32xf32>
      %30 = math.rsqrt %29 : vector<1x32xf32>
      %c0_21 = arith.constant 0 : index
      %c0_22 = arith.constant 0 : index
      %31 = vector.load %arg3[%c0_21, %c0_22] : memref<1x32xf32, #tpu.memory_space<vmem>>, vector<1x32xf32>
      %32 = arith.mulf %30, %31 : vector<1x32xf32>
      %c0_23 = arith.constant 0 : index
      %c0_24 = arith.constant 0 : index
      %33 = vector.load %arg5[%c0_23, %c0_24] : memref<1x32xf32, #tpu.memory_space<vmem>>, vector<1x32xf32>
      tpu.vector_store %arg5[%c0_23, %c0_24], %32 {strides = array<i32>} : memref<1x32xf32, #tpu.memory_space<vmem>>, vector<1x32xf32>,
      %c0_25 = arith.constant 0 : index
      %c0_26 = arith.constant 0 : index
      %34 = vector.load %arg4[%c0_25, %c0_26] : memref<1x32xf32, #tpu.memory_space<vmem>>, vector<1x32xf32>
      %35 = arith.mulf %20, %32 : vector<1x32xf32>
      %36 = arith.subf %34, %35 : vector<1x32xf32>
      %c0_27 = arith.constant 0 : index
      %c0_28 = arith.constant 0 : index
      %37 = vector.load %arg6[%c0_27, %c0_28] : memref<1x32xf32, #tpu.memory_space<vmem>>, vector<1x32xf32>
      tpu.vector_store %arg6[%c0_27, %c0_28], %36 {strides = array<i32>} : memref<1x32xf32, #tpu.memory_space<vmem>>, vector<1x32xf32>,
    } else {
    }
    return
  }
  func.func @transform_0(%arg0: i32, %arg1: i32) -> (i32, i32) {
    %c0_i32 = arith.constant 0 : i32
    return %arg1, %arg0 : i32, i32
  }
  func.func @transform_1(%arg0: i32, %arg1: i32) -> (i32, i32) {
    %c0_i32 = arith.constant 0 : i32
    %c0_i32_0 = arith.constant 0 : i32
    return %c0_i32, %arg0 : i32, i32
  }
  func.func @transform_2(%arg0: i32, %arg1: i32) -> (i32, i32) {
    %c0_i32 = arith.constant 0 : i32
    %c0_i32_0 = arith.constant 0 : i32
    return %c0_i32, %arg0 : i32, i32
  }
  func.func @transform_3(%arg0: i32, %arg1: i32) -> (i32, i32) {
    %c0_i32 = arith.constant 0 : i32
    %c0_i32_0 = arith.constant 0 : i32
    return %c0_i32, %arg0 : i32, i32
  }
  func.func @transform_4(%arg0: i32, %arg1: i32) -> (i32, i32) {
    %c0_i32 = arith.constant 0 : i32
    %c0_i32_0 = arith.constant 0 : i32
    return %c0_i32, %arg0 : i32, i32
  }
}

module attributes {stable_mosaic.version = 11 : i64} {
  func.func @cutlayer_mm_kernel(%arg0: i32, %arg1: i32, %arg2: i32, %arg3: memref<8x32xbf16, #tpu.memory_space<vmem>>, %arg4: memref<32x128xbf16, #tpu.memory_space<vmem>>, %arg5: memref<1x128xf32, #tpu.memory_space<vmem>>, %arg6: memref<8x128xf32, #tpu.memory_space<vmem>>, %arg7: memref<8x128xf32, #tpu.memory_space<vmem>>) attributes {dimension_semantics = [#tpu.dimension_semantics<parallel>, #tpu.dimension_semantics<parallel>, #tpu.dimension_semantics<arbitrary>], iteration_bounds = array<i64: 1, 1, 1>, scalar_prefetch = 0 : i64, scratch_operands = 1 : i64, tpu.core_type = #tpu.core_type<tc>, window_params = [{transform_indices = @transform_0, window_bounds = array<i64: 8, 32>}, {transform_indices = @transform_1, window_bounds = array<i64: 32, 128>}, {transform_indices = @transform_2, window_bounds = array<i64: 1, 128>}, {transform_indices = @transform_3, window_bounds = array<i64: 8, 128>}]} {
    %c0_i32 = arith.constant 0 : i32
    %0 = arith.cmpi eq, %arg2, %c0_i32 : i32
    %1 = arith.extui %0 : i1 to i32
    %c0_i32_0 = arith.constant 0 : i32
    %2 = arith.cmpi ne, %1, %c0_i32_0 : i32
    scf.if %2 {
      %cst_10 = arith.constant 0.000000e+00 : f32
      %12 = vector.broadcast %cst_10 : f32 to vector<8x128xf32>
      %c0_11 = arith.constant 0 : index
      %c0_12 = arith.constant 0 : index
      %13 = vector.load %arg7[%c0_11, %c0_12] : memref<8x128xf32, #tpu.memory_space<vmem>>, vector<8x128xf32>
      tpu.vector_store %arg7[%c0_11, %c0_12], %12 {strides = array<i32>} : memref<8x128xf32, #tpu.memory_space<vmem>>, vector<8x128xf32>,
    } else {
    }
    %c0 = arith.constant 0 : index
    %c0_1 = arith.constant 0 : index
    %3 = vector.load %arg7[%c0, %c0_1] : memref<8x128xf32, #tpu.memory_space<vmem>>, vector<8x128xf32>
    %c0_2 = arith.constant 0 : index
    %c0_3 = arith.constant 0 : index
    %4 = vector.load %arg3[%c0_2, %c0_3] : memref<8x32xbf16, #tpu.memory_space<vmem>>, vector<8x32xbf16>
    %c0_4 = arith.constant 0 : index
    %c0_5 = arith.constant 0 : index
    %5 = vector.load %arg4[%c0_4, %c0_5] : memref<32x128xbf16, #tpu.memory_space<vmem>>, vector<32x128xbf16>
    %cst = arith.constant dense<0.000000e+00> : vector<8x128xf32>
    %6 = tpu.matmul %4, %5, %cst {dimension_numbers = #tpu.dot_dimension_numbers<[1], [0], [0], [1], [0, 0, 1, 1], [], []>} : vector<8x32xbf16>, vector<32x128xbf16>, vector<8x128xf32> -> vector<8x128xf32>
    %7 = arith.addf %3, %6 : vector<8x128xf32>
    %c0_6 = arith.constant 0 : index
    %c0_7 = arith.constant 0 : index
    %8 = vector.load %arg7[%c0_6, %c0_7] : memref<8x128xf32, #tpu.memory_space<vmem>>, vector<8x128xf32>
    tpu.vector_store %arg7[%c0_6, %c0_7], %7 {strides = array<i32>} : memref<8x128xf32, #tpu.memory_space<vmem>>, vector<8x128xf32>,
    %c0_i32_8 = arith.constant 0 : i32
    %9 = arith.cmpi eq, %arg2, %c0_i32_8 : i32
    %10 = arith.extui %9 : i1 to i32
    %c0_i32_9 = arith.constant 0 : i32
    %11 = arith.cmpi ne, %10, %c0_i32_9 : i32
    scf.if %11 {
      %c0_10 = arith.constant 0 : index
      %c0_11 = arith.constant 0 : index
      %12 = vector.load %arg7[%c0_10, %c0_11] : memref<8x128xf32, #tpu.memory_space<vmem>>, vector<8x128xf32>
      %c0_12 = arith.constant 0 : index
      %c0_13 = arith.constant 0 : index
      %13 = vector.load %arg5[%c0_12, %c0_13] : memref<1x128xf32, #tpu.memory_space<vmem>>, vector<1x128xf32>
      %14 = vector.broadcast %13 : vector<1x128xf32> to vector<8x128xf32>
      %15 = arith.addf %12, %14 : vector<8x128xf32>
      %c0_14 = arith.constant 0 : index
      %c0_15 = arith.constant 0 : index
      %16 = vector.load %arg6[%c0_14, %c0_15] : memref<8x128xf32, #tpu.memory_space<vmem>>, vector<8x128xf32>
      tpu.vector_store %arg6[%c0_14, %c0_15], %15 {strides = array<i32>} : memref<8x128xf32, #tpu.memory_space<vmem>>, vector<8x128xf32>,
    } else {
    }
    return
  }
  func.func @transform_0(%arg0: i32, %arg1: i32, %arg2: i32) -> (i32, i32) {
    %c0_i32 = arith.constant 0 : i32
    return %arg0, %arg2 : i32, i32
  }
  func.func @transform_1(%arg0: i32, %arg1: i32, %arg2: i32) -> (i32, i32) {
    %c0_i32 = arith.constant 0 : i32
    return %arg2, %arg1 : i32, i32
  }
  func.func @transform_2(%arg0: i32, %arg1: i32, %arg2: i32) -> (i32, i32) {
    %c0_i32 = arith.constant 0 : i32
    %c0_i32_0 = arith.constant 0 : i32
    return %c0_i32, %arg1 : i32, i32
  }
  func.func @transform_3(%arg0: i32, %arg1: i32, %arg2: i32) -> (i32, i32) {
    %c0_i32 = arith.constant 0 : i32
    return %arg0, %arg1 : i32, i32
  }
}

</mosaic_0001>

<llo_original>
// kernel: cutlayer_forward.4
$region0: #{cutlayer_forward.4}
  #allocation0 [shape = 'u32[]', space=smem, size = 0x4, offset = 0x4, fixed_abs, tag = 'smem constant byte address 0x4 - core index']
  #allocation1 [shape = 'u32[144,128]{1,0:T(1,128)}', space=vmem, size = 0x12000, scoped, tag = 'internal scratch']
  %s0 = inlined_call_operand.vmem [shape: f32[8,32], index: 0, kind: input, shape index: {}]
  %s1 = inlined_call_operand.vmem [shape: f32[1,32], index: 1, kind: input, shape index: {}]
  %s2 = inlined_call_operand.vmem [shape: f32[1,32], index: 2, kind: input, shape index: {}]
  %s3 = inlined_call_operand.vmem [shape: bf16[8,32], index: 3, kind: output, shape index: {}]
  %s4 = sld [smem:[#allocation0]]
  $region22: #{cutlayer_forward.4} parent=0
    _
  %s6 = ssub.s32 1, %s4
  %s7 = scalar_select 0, %s6, %s4
  // Predicated region
  $region2: #{cutlayer_forward.4} parent=0 // pred_check
    _
  $region3: #{cutlayer_forward.4} parent=0 // pred_check_branch
    %9 = sbr.rel (0) target = $region5
  $region4: #{cutlayer_forward.4} parent=0 // pred_region
    _
  $region5: #{cutlayer_forward.4} parent=0 // pred_fallthru
    _
  // Predicated region
  $region6: #{cutlayer_forward.4} parent=0 // pred_check
    _
  $region7: #{cutlayer_forward.4} parent=0 // pred_check_branch
    %11 = sbr.rel (0) target = $region9
  $region8: #{cutlayer_forward.4} parent=0 // pred_region
    _
  $region9: #{cutlayer_forward.4} parent=0 // pred_fallthru
    _
  // Predicated region
  $region10: #{cutlayer_forward.4} parent=0 // pred_check
    _
  $region11: #{cutlayer_forward.4} parent=0 // pred_check_branch
    %13 = sbr.rel (0) target = $region13
  $region12: #{cutlayer_forward.4} parent=0 // pred_region
    _
  $region13: #{cutlayer_forward.4} parent=0 // pred_fallthru
    _
  %v14 = vld [vmem:[%s0] sm:$0xff]
  %v15 = vld [vmem:[%s1] sm:$0x1]
  %v17 = vlaneseq
  %v18 = vshrl.u32 %v17, 7
  %v19 = vsub.s32 0, %v18
  %v20 = vrot.slane %v15, %v19
  %v22 = vmul.f32 %v14, %v20
  %v23 = vld [vmem:[%s2] sm:$0x1]
  %v25 = vlaneseq
  %v26 = vshrl.u32 %v25, 7
  %v27 = vsub.s32 0, %v26
  %v28 = vrot.slane %v23, %v27
  %v30 = vadd.f32 %v22, %v28
  %v31 = vmax.f32 %v30, 0.0
  %v32 = vpack.c.bf16 %v31, %v31
  %vm33 = vcmask 257024
  %34 = vst.msk [vmem:[%s3] sm:$0xf] %vm33, %v32
  // Predicated region
  $region14: #{cutlayer_forward.4} parent=0 // pred_check
    _
  $region15: #{cutlayer_forward.4} parent=0 // pred_check_branch
    %36 = sbr.rel (0) target = $region17
  $region16: #{cutlayer_forward.4} parent=0 // pred_region
    _
  $region17: #{cutlayer_forward.4} parent=0 // pred_fallthru
    _
  // Predicated region
  $region18: #{cutlayer_forward.4} parent=0 // pred_check
    _
  $region19: #{cutlayer_forward.4} parent=0 // pred_check_branch
    %38 = sbr.rel (0) target = $region21
  $region20: #{cutlayer_forward.4} parent=0 // pred_region
    _
  $region21: #{cutlayer_forward.4} parent=0 // pred_fallthru
    _

// kernel: cutlayer_forward.3
$region0: #{cutlayer_forward.3}
  #allocation0 [shape = 'u32[]', space=smem, size = 0x4, offset = 0x4, fixed_abs, tag = 'smem constant byte address 0x4 - core index']
  #allocation1 [shape = 'u32[144,128]{1,0:T(1,128)}', space=vmem, size = 0x12000, scoped, tag = 'internal scratch']
  #allocation2 [shape = 'f32[1,32]{1,0:T(1,128)}', space=vmem, size = 0x200, scoped, tag = 'scratch operand']
  #allocation3 [shape = 'f32[1,32]{1,0:T(1,128)}', space=vmem, size = 0x200, scoped, tag = 'scratch operand']
  %s0 = inlined_call_operand.hbm [shape: f32[8,32], index: 0, kind: input, shape index: {}]
  %s1 = inlined_call_operand.hbm [shape: f32[1,32], index: 1, kind: input, shape index: {}]
  %s2 = inlined_call_operand.hbm [shape: f32[1,32], index: 2, kind: input, shape index: {}]
  %s3 = inlined_call_operand.vmem [shape: f32[1,32], index: 3, kind: output, shape index: {0}]
  %s4 = inlined_call_operand.vmem [shape: f32[1,32], index: 4, kind: output, shape index: {1}]
  %5 = xla_tuple %s3, %s4
  %s6 = sld [smem:[#allocation0]]
  $region50: #{cutlayer_forward.3} parent=0
    _
  %s8 = ssub.s32 1, %s6
  %s9 = scalar_select 0, %s8, %s6
  $region1: #{cutlayer_forward.3} parent=0
    #allocation4 [shape = 'u8[4096]{0}', space=vmem, size = 0x1000, scoped, tag = 'input window, operand 0, single buffered']
    #allocation5 [shape = 's32[1]{0}', space=sflag, size = 0x4, scoped, tag = 'scoped memory for cutlayer_forward.3']
    #allocation6 [shape = 'u8[512]{0}', space=vmem, size = 0x400, scoped, tag = 'input window, operand 1, single buffered']
    #allocation7 [shape = 's32[1]{0}', space=sflag, size = 0x4, scoped, tag = 'scoped memory for cutlayer_forward.3']
    #allocation8 [shape = 'u8[512]{0}', space=vmem, size = 0x400, scoped, tag = 'input window, operand 2, single buffered']
    %10 = vsyncpa [#allocation5], 0
    %11 = vsyncpa [#allocation7], 0
    // Predicated region
    $region2: #{cutlayer_forward.3} parent=1 // pred_check
      _
    $region3: #{cutlayer_forward.3} parent=1 // pred_check_branch
      %13 = sbr.rel (0) target = $region5
    $region4: #{cutlayer_forward.3} parent=1 // pred_region
      %s15 = ssub.s32 128, 128
      %16 = vsyncadd [#allocation5], %s15
      %s18 = sshll.u32 [#allocation4], 4
      %s19 = int_to_ptr.vmem [resolvable:$true] %s18
      %21 = dma.hbm_to_vmem [thread:$0]  %s0, 128, %s19, [#allocation5]
    $region5: #{cutlayer_forward.3} parent=1 // pred_fallthru
      _
    // Predicated region
    $region6: #{cutlayer_forward.3} parent=1 // pred_check
      _
    $region7: #{cutlayer_forward.3} parent=1 // pred_check_branch
      %23 = sbr.rel (0) target = $region9
    $region8: #{cutlayer_forward.3} parent=1 // pred_region
      %s25 = ssub.s32 16, 16
      %26 = vsyncadd [#allocation7], %s25
      %s28 = sshll.u32 [#allocation6], 4
      %s29 = int_to_ptr.vmem [resolvable:$true] %s28
      %31 = dma.hbm_to_vmem [thread:$0]  %s1, 16, %s29, [#allocation7]
    $region9: #{cutlayer_forward.3} parent=1 // pred_fallthru
      _
    // Predicated region
    $region10: #{cutlayer_forward.3} parent=1 // pred_check
      _
    $region11: #{cutlayer_forward.3} parent=1 // pred_check_branch
      %33 = sbr.rel (0) target = $region13
    $region12: #{cutlayer_forward.3} parent=1 // pred_region
      %s35 = ssub.s32 16, 16
      %36 = vsyncadd [#allocation7], %s35
      %s38 = sshll.u32 [#allocation8], 4
      %s39 = int_to_ptr.vmem [resolvable:$true] %s38
      %41 = dma.hbm_to_vmem [thread:$0]  %s2, 16, %s39, [#allocation7]
    $region13: #{cutlayer_forward.3} parent=1 // pred_fallthru
      _
    // Predicated region
    $region14: #{cutlayer_forward.3} parent=1 // pred_check
      _
    $region15: #{cutlayer_forward.3} parent=1 // pred_check_branch
      %43 = sbr.rel (0) target = $region17
    $region16: #{cutlayer_forward.3} parent=1 // pred_region
      %44 = dma.done [#allocation5], 128
    $region17: #{cutlayer_forward.3} parent=1 // pred_fallthru
      _
    // Predicated region
    $region18: #{cutlayer_forward.3} parent=1 // pred_check
      _
    $region19: #{cutlayer_forward.3} parent=1 // pred_check_branch
      %46 = sbr.rel (0) target = $region21
    $region20: #{cutlayer_forward.3} parent=1 // pred_region
      %47 = dma.done [#allocation7], 16
    $region21: #{cutlayer_forward.3} parent=1 // pred_fallthru
      _
    // Predicated region
    $region22: #{cutlayer_forward.3} parent=1 // pred_check
      _
    $region23: #{cutlayer_forward.3} parent=1 // pred_check_branch
      %49 = sbr.rel (0) target = $region25
    $region24: #{cutlayer_forward.3} parent=1 // pred_region
      %50 = dma.done [#allocation7], 16
    $region25: #{cutlayer_forward.3} parent=1 // pred_fallthru
      _
    %p51 = scmp.eq.s32.totalorder 0, 0
    // Predicated region
    $region26: #{cutlayer_forward.3} parent=1 // pred_check
      %p52 = pneg %p51
    $region27: #{cutlayer_forward.3} parent=1 // pred_check_branch
      %54 = sbr.rel (%p52) target = $region29
    $region28: #{cutlayer_forward.3} parent=1 // pred_region
      %vm55 = vcmask 253952
      %56 = vst.msk [vmem:[#allocation2] sm:$0x1] %vm55, 0.0
      %57 = vst.msk [vmem:[#allocation3] sm:$0x1] %vm55, 0.0
    $region29: #{cutlayer_forward.3} parent=1 // pred_fallthru
      _
    %v58 = vld [vmem:[#allocation4] sm:$0xff]
    %v59 = vld [vmem:[#allocation2] sm:$0x1]
    %vm60 = vcmask 261120
    %v61 = vsel %vm60, %v58, 0.0
    %v62 = vrot.slane %v61, 4
    %v63 = vadd.f32 %v61, %v62
    %v64 = vrot.slane %v63, 2
    %v65 = vadd.f32 %v63, %v64
    %v66 = vrot.slane %v65, 1
    %v67 = vadd.f32 %v65, %v66
    %v68 = vadd.f32 %v59, %v67
    %vm69 = vcmask 253952
    %70 = vst.msk [vmem:[#allocation2] sm:$0x1] %vm69, %v68
    %v71 = vld [vmem:[#allocation3] sm:$0x1]
    %v72 = vmul.f32 %v58, %v58
    %v73 = vsel %vm60, %v72, 0.0
    %v74 = vrot.slane %v73, 4
    %v75 = vadd.f32 %v73, %v74
    %v76 = vrot.slane %v75, 2
    %v77 = vadd.f32 %v75, %v76
    %v78 = vrot.slane %v77, 1
    %v79 = vadd.f32 %v77, %v78
    %v80 = vadd.f32 %v71, %v79
    %81 = vst.msk [vmem:[#allocation3] sm:$0x1] %vm69, %v80
    // Predicated region
    $region30: #{cutlayer_forward.3} parent=1 // pred_check
      %p82 = pneg %p51
    $region31: #{cutlayer_forward.3} parent=1 // pred_check_branch
      %84 = sbr.rel (%p82) target = $region33
    $region32: #{cutlayer_forward.3} parent=1 // pred_region
      %v85 = vld [vmem:[#allocation2] sm:$0x1]
      %v86 = vmul.f32 %v85, 0.125
      %v87 = vld [vmem:[#allocation3] sm:$0x1]
      %v88 = vmul.f32 %v87, 0.125
      %v89 = vmul.f32 %v86, %v86
      %v90 = vsub.f32 %v88, %v89
      %v91 = vmax.f32 %v90, 0.0
      %v92 = vadd.f32 %v91, 1e-05
      %v93 = vrsqrt.pop %v92
      %v94 = vld [vmem:[#allocation6] sm:$0x1]
      %v95 = vmul.f32 %v93, %v94
      %96 = vst.msk [vmem:[%s3] sm:$0x1] %vm69, %v95
      %v97 = vld [vmem:[#allocation8] sm:$0x1]
      %v98 = vmul.f32 %v86, %v95
      %v99 = vsub.f32 %v97, %v98
      %100 = vst.msk [vmem:[%s4] sm:$0x1] %vm69, %v99
    $region33: #{cutlayer_forward.3} parent=1 // pred_fallthru
      _
    // Predicated region
    $region34: #{cutlayer_forward.3} parent=1 // pred_check
      _
    $region35: #{cutlayer_forward.3} parent=1 // pred_check_branch
      %102 = sbr.rel (0) target = $region37
    $region36: #{cutlayer_forward.3} parent=1 // pred_region
      _
    $region37: #{cutlayer_forward.3} parent=1 // pred_fallthru
      _
    // Predicated region
    $region38: #{cutlayer_forward.3} parent=1 // pred_check
      _
    $region39: #{cutlayer_forward.3} parent=1 // pred_check_branch
      %104 = sbr.rel (0) target = $region41
    $region40: #{cutlayer_forward.3} parent=1 // pred_region
      _
    $region41: #{cutlayer_forward.3} parent=1 // pred_fallthru
      _
    // Predicated region
    $region42: #{cutlayer_forward.3} parent=1 // pred_check
      _
    $region43: #{cutlayer_forward.3} parent=1 // pred_check_branch
      %106 = sbr.rel (0) target = $region45
    $region44: #{cutlayer_forward.3} parent=1 // pred_region
      _
    $region45: #{cutlayer_forward.3} parent=1 // pred_fallthru
      _
    // Predicated region
    $region46: #{cutlayer_forward.3} parent=1 // pred_check
      _
    $region47: #{cutlayer_forward.3} parent=1 // pred_check_branch
      %108 = sbr.rel (0) target = $region49
    $region48: #{cutlayer_forward.3} parent=1 // pred_region
      _
    $region49: #{cutlayer_forward.3} parent=1 // pred_fallthru
      _
    %109 = vsyncpa [#allocation5], 1
    %110 = vsyncpa [#allocation7], 1

// kernel: cutlayer_forward.5
$region0: #{cutlayer_forward.5}
  #allocation0 [shape = 'u32[]', space=smem, size = 0x4, offset = 0x4, fixed_abs, tag = 'smem constant byte address 0x4 - core index']
  #allocation1 [shape = 'u32[144,128]{1,0:T(1,128)}', space=vmem, size = 0x12000, scoped, tag = 'internal scratch']
  #allocation2 [shape = 'f32[8,128]{1,0:T(8,128)}', space=vmem, size = 0x1000, scoped, tag = 'scratch operand']
  %s0 = inlined_call_operand.vmem [shape: bf16[8,32], index: 0, kind: input, shape index: {}]
  %s1 = inlined_call_operand.vmem [shape: bf16[32,128], index: 1, kind: input, shape index: {}]
  %s2 = inlined_call_operand.vmem [shape: f32[1,128], index: 2, kind: input, shape index: {}]
  %s3 = inlined_call_operand.hbm [shape: f32[8,128], index: 3, kind: output, shape index: {}]
  %s4 = sld [smem:[#allocation0]]
  $region30: #{cutlayer_forward.5} parent=0
    _
  %s6 = ssub.s32 1, %s4
  %s7 = scalar_select 0, %s6, %s4
  $region1: #{cutlayer_forward.5} parent=0
    #allocation3 [shape = 'u8[4096]{0}', space=vmem, size = 0x1000, scoped, tag = 'output window, operand 0, single buffered']
    #allocation4 [shape = 's32[1]{0}', space=sflag, size = 0x4, scoped, tag = 'scoped memory for cutlayer_forward.5']
    %8 = vsyncpa [#allocation4], 0
    // Predicated region
    $region2: #{cutlayer_forward.5} parent=1 // pred_check
      _
    $region3: #{cutlayer_forward.5} parent=1 // pred_check_branch
      %10 = sbr.rel (0) target = $region5
    $region4: #{cutlayer_forward.5} parent=1 // pred_region
      _
    $region5: #{cutlayer_forward.5} parent=1 // pred_fallthru
      _
    // Predicated region
    $region6: #{cutlayer_forward.5} parent=1 // pred_check
      _
    $region7: #{cutlayer_forward.5} parent=1 // pred_check_branch
      %12 = sbr.rel (0) target = $region9
    $region8: #{cutlayer_forward.5} parent=1 // pred_region
      _
    $region9: #{cutlayer_forward.5} parent=1 // pred_fallthru
      _
    // Predicated region
    $region10: #{cutlayer_forward.5} parent=1 // pred_check
      _
    $region11: #{cutlayer_forward.5} parent=1 // pred_check_branch
      %14 = sbr.rel (0) target = $region13
    $region12: #{cutlayer_forward.5} parent=1 // pred_region
      _
    $region13: #{cutlayer_forward.5} parent=1 // pred_fallthru
      _
    %p16 = scmp.eq.s32.totalorder 0, 0
    // Predicated region
    $region14: #{cutlayer_forward.5} parent=1 // pred_check
      %p17 = pneg %p16
    $region15: #{cutlayer_forward.5} parent=1 // pred_check_branch
      %19 = sbr.rel (%p17) target = $region17
    $region16: #{cutlayer_forward.5} parent=1 // pred_region
      %20 = vst [vmem:[#allocation2] sm:$0xff] 0.0
    $region17: #{cutlayer_forward.5} parent=1 // pred_fallthru
      _
    %v21 = vld [vmem:[#allocation2] sm:$0xff]
    %v22 = vld [vmem:[%s0] sm:$0xf]
    %v23 = vld [vmem:[%s1] sm:$0xf]
    %v24 = vld [vmem:[%s1 + $0x4] sm:$0xf]
    %v25 = vld [vmem:[%s1 + $0x8] sm:$0xf]
    %v26 = vld [vmem:[%s1 + $0xc] sm:$0xf]
    %v31 = vunpack.c.l.b16 %v23
    %v32 = vunpack.c.l.b16 %v24
    %v33 = vunpack.c.l.b16 %v25
    %v34 = vunpack.c.l.b16 %v26
    %v35 = vpack.c.b16 %v32, %v31
    %v36 = vpack.c.b16 %v34, %v33
    %vm39 = vcmask 261120
    %v41 = vsel %vm39, %v22, 0
    %43 = vmatprep.subr.bf16.mxu0 0
    %44 = vmatpush1.bf16.msra.mxu0 0
    %45 = vmatprep.subr.bf16.mxu0 0
    %46 = vmatpush1.bf16.msra.mxu0 0
    %47 = vmatprep.subr.bf16.mxu0 0
    %48 = vmatpush1.bf16.msra.mxu0 0
    %49 = vmatprep.subr.bf16.mxu0 0
    %50 = vmatpush1.bf16.msra.mxu0 0
    %51 = vmatprep.subr.bf16.mxu0 0
    %52 = vmatpush1.bf16.msra.mxu0 0
    %53 = vmatprep.subr.bf16.mxu0 0
    %54 = vmatpush1.bf16.msra.mxu0 0
    %55 = vmatprep.subr.bf16.mxu0 0
    %56 = vmatpush1.bf16.msra.mxu0 %v36
    %57 = vmatprep.subr.bf16.mxu0 0
    %58 = vmatpush1.bf16.msra.mxu0 %v35
    %59 = vmatprep.subr.bf16.mxu0 0
    %60 = vmatpush2.bf16.msra.mxu0 0
    %61 = vmatprep.subr.bf16.mxu0 0
    %62 = vmatpush2.bf16.msra.mxu0 0
    %63 = vmatprep.subr.bf16.mxu0 0
    %64 = vmatpush2.bf16.msra.mxu0 0
    %65 = vmatprep.subr.bf16.mxu0 0
    %66 = vmatpush2.bf16.msra.mxu0 0
    %67 = vmatprep.subr.bf16.mxu0 0
    %68 = vmatpush2.bf16.msra.mxu0 0
    %69 = vmatprep.subr.bf16.mxu0 0
    %70 = vmatpush2.bf16.msra.mxu0 0
    %71 = vmatprep.subr.bf16.mxu0 0
    %72 = vmatpush2.bf16.msra.mxu0 0
    %73 = vmatprep.subr.bf16.mxu0 0
    %74 = vmatpush2.bf16.msra.mxu0 0
    %75 = vmatprep.mubr.bf16.mxu0 0
    %76 = vmatmul.mubr.bf16.gmra.mxu0 %v41
    %v77 = vpop.f32.mrf.mxu0
    %v78 = vadd.f32 0.0, %v77
    %v79 = vpop.f32.mrf.mxu0
    %v80 = vpop.f32.mrf.mxu0
    %v81 = vpop.f32.mrf.mxu0
    %82 = vdwg.mxu0
    %v83 = vadd.f32 %v21, %v78
    %84 = vst [vmem:[#allocation2] sm:$0xff] %v83
    // Predicated region
    $region18: #{cutlayer_forward.5} parent=1 // pred_check
      %p85 = pneg %p16
    $region19: #{cutlayer_forward.5} parent=1 // pred_check_branch
      %87 = sbr.rel (%p85) target = $region21
    $region20: #{cutlayer_forward.5} parent=1 // pred_region
      %v88 = vld [vmem:[#allocation2] sm:$0xff]
      %v89 = vld [vmem:[%s2] sm:$0x1]
      %v91 = vlaneseq
      %v92 = vshrl.u32 %v91, 7
      %v93 = vsub.s32 0, %v92
      %v94 = vrot.slane %v89, %v93
      %v96 = vadd.f32 %v88, %v94
      %97 = vst [vmem:[#allocation3] sm:$0xff] %v96
    $region21: #{cutlayer_forward.5} parent=1 // pred_fallthru
      _
    // Predicated region
    $region22: #{cutlayer_forward.5} parent=1 // pred_check
      _
    $region23: #{cutlayer_forward.5} parent=1 // pred_check_branch
      %99 = sbr.rel (0) target = $region25
    $region24: #{cutlayer_forward.5} parent=1 // pred_region
      %s101 = ssub.s32 128, 128
      %102 = vsyncadd [#allocation4], %s101
      %s104 = sshll.u32 [#allocation3], 4
      %s105 = int_to_ptr.vmem [resolvable:$true] %s104
      %107 = dma.vmem_to_hbm [thread:$0]  %s105, 128, %s3, [#allocation4]
    $region25: #{cutlayer_forward.5} parent=1 // pred_fallthru
      _
    // Predicated region
    $region26: #{cutlayer_forward.5} parent=1 // pred_check
      _
    $region27: #{cutlayer_forward.5} parent=1 // pred_check_branch
      %109 = sbr.rel (0) target = $region29
    $region28: #{cutlayer_forward.5} parent=1 // pred_region
      %110 = dma.done [#allocation4], 128
    $region29: #{cutlayer_forward.5} parent=1 // pred_fallthru
      _
    %111 = vsyncpa [#allocation4], 1

</llo_original>
